<compile_context>
chip_gen: v7x
topology: tpu7x:2x2x1
jax: 0.10.0
libtpu: 0.0.40
codegen_flags: <defaults>
</compile_context>

<pallas_src>
import functools
import math

import jax
import jax.numpy as jnp
from jax.experimental import pallas as pl
from jax.experimental.pallas import tpu as pltpu


def _pos_enc_kernel(seed_ref, x_ref, pe_ref, o_ref, *, dropout_p, training):
    # x_ref: (TS, bs, d), pe_ref: (TS, d), o_ref: (TS, bs, d)
    val = x_ref[...] + pe_ref[...][:, None, :]          # broadcast pe over batch in-register
    if training and dropout_p > 0.0:
        # Inverted dropout, seeded per sequence tile so tiles are independent / parallel-safe.
        pltpu.prng_seed(seed_ref[0] + pl.program_id(0))
        bits = pltpu.bitcast(pltpu.prng_random_bits(val.shape), jnp.uint32)
        u = (bits >> 9).astype(jnp.float32) * (1.0 / (1 << 23))   # uniform in [0, 1)
        keep = u >= jnp.float32(dropout_p)
        val = jnp.where(keep, val * (1.0 / (1.0 - dropout_p)), 0.0)
    o_ref[...] = val.astype(o_ref.dtype)


def _pick_block_seq(seq, bs, d, block_seq=None, target_bytes=4 * 1024 * 1024):
    """Sequence tile: multiple of 8, sized so double-buffered x/out/pe tiles stay small."""
    if block_seq is not None:
        ts = max(8, (int(block_seq) // 8) * 8)
    else:
        per_row = (2 * bs * d + d) * 4 * 2   # f32: x + out (double-buffered) + pe tile
        ts = max(8, min(1024, target_bytes // max(per_row, 1)))
        ts = (ts // 8) * 8
    if ts >= seq or seq % 8 != 0:
        # Fall back to a single full-extent block (always legal w.r.t. the (8,128) rule).
        return seq
    return ts


def pos_enc_pallas(x, pe, *, dropout_p=0.0, training=False, seed=0, block_seq=None):
    """x: (seq, bs, d) f32, pe: (max_len, d) f32 -> (seq, bs, d)."""
    seq, bs, d = x.shape
    pe_s = pe[:seq]                                   # (seq, d) rows actually needed
    ts = _pick_block_seq(seq, bs, d, block_seq)
    grid = (pl.cdiv(seq, ts),)
    seed_arr = jnp.array([seed], dtype=jnp.int32)

    kernel = functools.partial(
        _pos_enc_kernel, dropout_p=float(dropout_p), training=bool(training))

    return pl.pallas_call(
        kernel,
        out_shape=jax.ShapeDtypeStruct((seq, bs, d), x.dtype),
        grid_spec=pltpu.PrefetchScalarGridSpec(
            num_scalar_prefetch=1,
            grid=grid,
            in_specs=[
                # x: tile over seq; (bs, d) stay full-extent (satisfies the (8,128) rule).
                pl.BlockSpec((ts, bs, d), lambda i, sref: (i, 0, 0)),
                # pe: same seq tiling, broadcast over batch inside the kernel.
                pl.BlockSpec((ts, d), lambda i, sref: (i, 0)),
            ],
            out_specs=pl.BlockSpec((ts, bs, d), lambda i, sref: (i, 0, 0)),
        ),
        compiler_params=pltpu.CompilerParams(
            dimension_semantics=("parallel",),        # shard seq tiles across v7x's 2 TCs
            vmem_limit_bytes=32 * 1024 * 1024,
        ),
    )(seed_arr, x, pe_s)


class PositionalEncodingPallas:
    """JAX/Pallas equivalent of the PyTorch PositionalEncoding module."""

    def __init__(self, d_model, dropout=0.1, max_len=5000):
        self.d_model = d_model
        self.dropout_p = float(dropout)
        self.max_len = max_len
        # Registered buffer: same construction as the PyTorch module.
        position = jnp.arange(max_len, dtype=jnp.float32)[:, None]
        div_term = jnp.exp(
            jnp.arange(0, d_model, 2, dtype=jnp.float32) * (-math.log(10000.0) / d_model))
        pe = jnp.zeros((max_len, d_model), jnp.float32)
        pe = pe.at[:, 0::2].set(jnp.sin(position * div_term))
        pe = pe.at[:, 1::2].set(jnp.cos(position * div_term))
        self.pe = pe   # (max_len, d_model); torch keeps (max_len, 1, d_model) — same values

    def __call__(self, x, *, training=False, seed=0, block_seq=None):
        # x: (seq_len, bs, d_model), matching the torch module's expected layout.
        return pos_enc_pallas(x, self.pe, dropout_p=self.dropout_p,
                              training=training, seed=seed, block_seq=block_seq)


if __name__ == "__main__":
    key = jax.random.PRNGKey(0)

    seq_len, bs, d_model = 64, 2, 32
    x = jax.random.normal(key, (seq_len, bs, d_model), jnp.float32)

    module = PositionalEncodingPallas(d_model, dropout=0.1, max_len=5000)

    # Eval-mode forward (dropout = identity); force block_seq=16 so the tiled/pipelined
    # grid path (grid=(4,)) is exercised even at this small demo shape.
    out = module(x, training=False, block_seq=16)
    out = jax.block_until_ready(out)

    # Reference in plain JAX.
    ref = x + module.pe[:seq_len][:, None, :]
    assert out.shape == (seq_len, bs, d_model)
    assert jnp.allclose(out, ref, atol=1e-6, rtol=1e-6)

    print("KERNEL_OK")
</pallas_src>

<mosaic_0001>
module attributes {stable_mosaic.version = 11 : i64} {
  func.func @_pos_enc_kernel(%arg0: i32, %arg1: memref<1xi32, #tpu.memory_space<smem>>, %arg2: memref<16x2x32xf32, #tpu.memory_space<vmem>>, %arg3: memref<16x32xf32, #tpu.memory_space<vmem>>, %arg4: memref<16x2x32xf32, #tpu.memory_space<vmem>>) attributes {dimension_semantics = [#tpu.dimension_semantics<parallel>], iteration_bounds = array<i64: 4>, scalar_prefetch = 1 : i64, scratch_operands = 0 : i64, tpu.core_type = #tpu.core_type<tc>, window_params = [{transform_indices = @transform_0, window_bounds = array<i64: 16, 2, 32>}, {transform_indices = @transform_1, window_bounds = array<i64: 16, 32>}, {transform_indices = @transform_2, window_bounds = array<i64: 16, 2, 32>}]} {
    %c0 = arith.constant 0 : index
    %c0_0 = arith.constant 0 : index
    %c0_1 = arith.constant 0 : index
    %0 = vector.load %arg2[%c0, %c0_0, %c0_1] : memref<16x2x32xf32, #tpu.memory_space<vmem>>, vector<16x2x32xf32>
    %c0_2 = arith.constant 0 : index
    %c0_3 = arith.constant 0 : index
    %1 = vector.load %arg3[%c0_2, %c0_3] : memref<16x32xf32, #tpu.memory_space<vmem>>, vector<16x32xf32>
    %2 = vector.shape_cast %1 : vector<16x32xf32> to vector<16x1x32xf32>
    %3 = vector.broadcast %2 : vector<16x1x32xf32> to vector<16x2x32xf32>
    %4 = arith.addf %0, %3 : vector<16x2x32xf32>
    %c0_4 = arith.constant 0 : index
    %c0_5 = arith.constant 0 : index
    %c0_6 = arith.constant 0 : index
    %5 = vector.load %arg4[%c0_4, %c0_5, %c0_6] : memref<16x2x32xf32, #tpu.memory_space<vmem>>, vector<16x2x32xf32>
    tpu.vector_store %arg4[%c0_4, %c0_5, %c0_6], %4 {strides = array<i32>} : memref<16x2x32xf32, #tpu.memory_space<vmem>>, vector<16x2x32xf32>,
    return
  }
  func.func @transform_0(%arg0: i32, %arg1: memref<1xi32, #tpu.memory_space<smem>>) -> (i32, i32, i32) {
    %c0_i32 = arith.constant 0 : i32
    %c0_i32_0 = arith.constant 0 : i32
    %c0_i32_1 = arith.constant 0 : i32
    return %arg0, %c0_i32, %c0_i32_0 : i32, i32, i32
  }
  func.func @transform_1(%arg0: i32, %arg1: memref<1xi32, #tpu.memory_space<smem>>) -> (i32, i32) {
    %c0_i32 = arith.constant 0 : i32
    %c0_i32_0 = arith.constant 0 : i32
    return %arg0, %c0_i32 : i32, i32
  }
  func.func @transform_2(%arg0: i32, %arg1: memref<1xi32, #tpu.memory_space<smem>>) -> (i32, i32, i32) {
    %c0_i32 = arith.constant 0 : i32
    %c0_i32_0 = arith.constant 0 : i32
    %c0_i32_1 = arith.constant 0 : i32
    return %arg0, %c0_i32, %c0_i32_0 : i32, i32, i32
  }
}

</mosaic_0001>

<llo_original>
// kernel: tpu_custom_call.1
$region0: #{tpu_custom_call.1}
  #allocation0 [shape = 'u32[]', space=smem, size = 0x4, offset = 0x4, fixed_abs, tag = 'smem constant byte address 0x4 - core index']
  #allocation1 [shape = 'u32[144,128]{1,0:T(1,128)}', space=vmem, size = 0x12000, scoped, tag = 'internal scratch']
  #allocation2 [shape = 's32[1]{0}', space=sflag, size = 0x4, scoped, tag = 'scoped memory for tpu_custom_call.1']
  #allocation3 [shape = 's32[1]{0:T(128)S(6)}', space=smem, size = 0x200, scoped, tag = 'prefetched SMEM operand 0']
  %s0 = inlined_call_operand.<no memory space> [shape: s32[1], index: 0, kind: input, shape index: {}]
  %s1 = inlined_call_operand.vmem [shape: f32[64,2,32], index: 1, kind: input, shape index: {}]
  %s2 = inlined_call_operand.vmem [shape: f32[64,32], index: 2, kind: input, shape index: {}]
  %s3 = inlined_call_operand.vmem [shape: f32[64,2,32], index: 3, kind: output, shape index: {}]
  %s4 = sld [smem:[#allocation0]]
  $region41: #{tpu_custom_call.1} parent=0
    _
  %s6 = ssub.s32 1, %s4
  %s7 = scalar_select 0, %s6, %s4
  %8 = sst [smem:[#allocation3]] %s0
  loop: start=0, step=1, limit=6
  $region2: #{tpu_custom_call.1} parent=0 // loop_pre_header
    _
  $region3: #{tpu_custom_call.1} parent=0 // loop_header
    %s10 = sphi 0, %s14
    %p11 = scmp.ge.s32.totalorder %s10, 6
    %s20 = sphi 0, %s22
    %s23 = sphi 0, %s20
    %s24 = sphi 0, %s23
    %s40 = sphi 0, %s24
    %s46 = sphi 0, %s48
    %s49 = sphi 0, %s46
    %s50 = sphi 0, %s49
    %s66 = sphi 0, %s50
    %s72 = sphi 0, %s74
    %s75 = sphi 0, %s72
    %s76 = sphi 0, %s75
    %s92 = sphi 0, %s76
  $region4: #{tpu_custom_call.1} parent=0 // loop_header_branch
    %13 = sbr.rel (%p11) target = $region8
  $region5: #{tpu_custom_call.1} parent=0 // loop_body
    %s15 = ssub.s32 %s10, 1
    %s16 = ssub.s32 %s10, 2
    %s17 = sadd.s32 %s10, 1
    %s18 = ssub.s32 %s10, %s17
    %p19 = scmp.eq.s32.totalorder %s18, 0
    %s21 = sadd.s32 %s20, 1
    %s22 = scalar_select %p19, %s20, %s21
    %p25 = pneg %p19
    %p26 = scmp.eq.s32.totalorder %s10, 3
    %p27 = por %p25, %p26
    %p28 = scmp.ne.s32.totalorder %s20, %s23
    %p29 = scmp.eq.s32.totalorder %s10, 0
    %p30 = por %p28, %p29
    %p31 = scmp.ne.s32.totalorder %s20, %s23
    %p32 = scmp.eq.s32.totalorder %s15, 3
    %p33 = por %p31, %p32
    %p34 = scmp.ne.s32.totalorder %s23, %s24
    %p35 = scmp.eq.s32.totalorder %s15, 0
    %p36 = por %p34, %p35
    %p37 = scmp.ne.s32.totalorder %s23, %s24
    %p38 = scmp.eq.s32.totalorder %s16, 3
    %p39 = por %p37, %p38
    %p41 = scmp.ne.s32.totalorder %s24, %s40
    %p42 = scmp.eq.s32.totalorder %s16, 0
    %p43 = por %p41, %p42
    %s44 = ssub.s32 %s10, %s17
    %p45 = scmp.eq.s32.totalorder %s44, 0
    %s47 = sadd.s32 %s46, 1
    %s48 = scalar_select %p45, %s46, %s47
    %p51 = pneg %p45
    %p52 = scmp.eq.s32.totalorder %s10, 3
    %p53 = por %p51, %p52
    %p54 = scmp.ne.s32.totalorder %s46, %s49
    %p55 = scmp.eq.s32.totalorder %s10, 0
    %p56 = por %p54, %p55
    %p57 = scmp.ne.s32.totalorder %s46, %s49
    %p58 = scmp.eq.s32.totalorder %s15, 3
    %p59 = por %p57, %p58
    %p60 = scmp.ne.s32.totalorder %s49, %s50
    %p61 = scmp.eq.s32.totalorder %s15, 0
    %p62 = por %p60, %p61
    %p63 = scmp.ne.s32.totalorder %s49, %s50
    %p64 = scmp.eq.s32.totalorder %s16, 3
    %p65 = por %p63, %p64
    %p67 = scmp.ne.s32.totalorder %s50, %s66
    %p68 = scmp.eq.s32.totalorder %s16, 0
    %p69 = por %p67, %p68
    %s70 = ssub.s32 %s10, %s17
    %p71 = scmp.eq.s32.totalorder %s70, 0
    %s73 = sadd.s32 %s72, 1
    %s74 = scalar_select %p71, %s72, %s73
    %p77 = pneg %p71
    %p78 = scmp.eq.s32.totalorder %s10, 3
    %p79 = por %p77, %p78
    %p80 = scmp.ne.s32.totalorder %s72, %s75
    %p81 = scmp.eq.s32.totalorder %s10, 0
    %p82 = por %p80, %p81
    %p83 = scmp.ne.s32.totalorder %s72, %s75
    %p84 = scmp.eq.s32.totalorder %s15, 3
    %p85 = por %p83, %p84
    %p86 = scmp.ne.s32.totalorder %s75, %s76
    %p87 = scmp.eq.s32.totalorder %s15, 0
    %p88 = por %p86, %p87
    %p89 = scmp.ne.s32.totalorder %s75, %s76
    %p90 = scmp.eq.s32.totalorder %s16, 3
    %p91 = por %p89, %p90
    %p93 = scmp.ne.s32.totalorder %s76, %s92
    %p94 = scmp.eq.s32.totalorder %s16, 0
    %p95 = por %p93, %p94
    %p96 = scmp.le.s32.totalorder 1, %s10
    %p97 = scmp.lt.s32.totalorder %s10, 5
    %p98 = pnand %p96, %p97
    %p99 = pneg %p98
    // Predicated region
    $region9: #{tpu_custom_call.1} parent=5 // pred_check
      _
    $region10: #{tpu_custom_call.1} parent=5 // pred_check_branch
      %101 = sbr.rel (%p98) target = $region12
    $region11: #{tpu_custom_call.1} parent=5 // pred_region
      %s102 = ssub.s32 %s10, 1
    $region12: #{tpu_custom_call.1} parent=5 // pred_fallthru
      _
    %p103 = scmp.lt.s32.totalorder %s10, 4
    // Predicated region
    $region13: #{tpu_custom_call.1} parent=5 // pred_check
      %p104 = pneg %p103
    $region14: #{tpu_custom_call.1} parent=5 // pred_check_branch
      %106 = sbr.rel (%p104) target = $region16
    $region15: #{tpu_custom_call.1} parent=5 // pred_region
      // Predicated region
      $region17: #{tpu_custom_call.1} parent=15 // pred_check
        %p107 = pneg %p30
      $region18: #{tpu_custom_call.1} parent=15 // pred_check_branch
        %109 = sbr.rel (%p107) target = $region20
      $region19: #{tpu_custom_call.1} parent=15 // pred_region
        %s110 = smul.u32 16, %s10
        %p111 = scmp.lt.s32.totalorder %s110, 63
        %s112 = scalar_select %p111, %s110, 63
        %s113 = smul.addr %s112, 2
        %s114 = scalar_lea.vmem %s1, %s113
        %s115 = smul.u32 16, %s10
      $region20: #{tpu_custom_call.1} parent=15 // pred_fallthru
        _
      // Predicated region
      $region21: #{tpu_custom_call.1} parent=15 // pred_check
        %p116 = pneg %p56
      $region22: #{tpu_custom_call.1} parent=15 // pred_check_branch
        %118 = sbr.rel (%p116) target = $region24
      $region23: #{tpu_custom_call.1} parent=15 // pred_region
        %s119 = smul.u32 2, %s10
        %p120 = scmp.lt.s32.totalorder %s119, 7
        %s121 = scalar_select %p120, %s119, 7
        %s122 = smul.addr %s121, 8
        %s123 = scalar_lea.vmem %s2, %s122
        %s124 = smul.u32 2, %s10
      $region24: #{tpu_custom_call.1} parent=15 // pred_fallthru
        _
    $region16: #{tpu_custom_call.1} parent=5 // pred_fallthru
      _
    %p125 = scmp.le.s32.totalorder 1, %s10
    %p126 = scmp.lt.s32.totalorder %s10, 5
    %p127 = pnand %p125, %p126
    %p128 = pneg %p127
    // Predicated region
    $region25: #{tpu_custom_call.1} parent=5 // pred_check
      _
    $region26: #{tpu_custom_call.1} parent=5 // pred_check_branch
      %130 = sbr.rel (%p127) target = $region28
    $region27: #{tpu_custom_call.1} parent=5 // pred_region
      %s131 = ssub.s32 %s10, 1
      %s132 = smul.u32 16, %s15
      %p133 = scmp.lt.s32.totalorder %s132, 63
      %s134 = scalar_select %p133, %s132, 63
      %s135 = smul.addr %s134, 2
      %s136 = scalar_lea.vmem %s1, %s135
      %p137 = pneg %p36
      %p138 = pneg %p33
      %s139 = smul.u32 2, %s15
      %p140 = scmp.lt.s32.totalorder %s139, 7
      %s141 = scalar_select %p140, %s139, 7
      %s142 = smul.addr %s141, 8
      %s143 = scalar_lea.vmem %s2, %s142
      %p144 = pneg %p62
      %p145 = pneg %p59
      %p146 = pneg %p88
      %p147 = pneg %p85
      %s148 = smul.u32 16, %s15
      %p149 = scmp.lt.s32.totalorder %s148, 63
      %s150 = scalar_select %p149, %s148, 63
      %s151 = smul.addr %s150, 2
      %s152 = scalar_lea.vmem %s3, %s151
      %s153 = smul.u32 16, %s15
      %p154 = scmp.lt.s32.totalorder %s153, 63
      %s155 = scalar_select %p154, %s153, 63
      %s156 = smul.addr %s155, 2
      %s157 = scalar_lea.vmem %s1, %s156
      %s158 = smul.u32 16, %s15
      %s159 = smul.u32 2, %s15
      %p160 = scmp.lt.s32.totalorder %s159, 7
      %s161 = scalar_select %p160, %s159, 7
      %s162 = smul.addr %s161, 8
      %s163 = scalar_lea.vmem %s2, %s162
      %s164 = smul.u32 2, %s15
      %s165 = smul.u32 16, %s15
      %p166 = scmp.lt.s32.totalorder %s165, 63
      %s167 = scalar_select %p166, %s165, 63
      %s168 = smul.addr %s167, 2
      %s169 = scalar_lea.vmem %s3, %s168
      %s170 = smul.u32 16, %s15
      %v171 = vld [vmem:[%s157] sm:$0x3]
      %v172 = vld [vmem:[%s157 + $0x2] sm:$0x3]
      %v173 = vld [vmem:[%s157 + $0x4] sm:$0x3]
      %v174 = vld [vmem:[%s157 + $0x6] sm:$0x3]
      %v175 = vld [vmem:[%s157 + $0x8] sm:$0x3]
      %v176 = vld [vmem:[%s157 + $0xa] sm:$0x3]
      %v177 = vld [vmem:[%s157 + $0xc] sm:$0x3]
      %v178 = vld [vmem:[%s157 + $0xe] sm:$0x3]
      %v179 = vld [vmem:[%s157 + $0x10] sm:$0x3]
      %v180 = vld [vmem:[%s157 + $0x12] sm:$0x3]
      %v181 = vld [vmem:[%s157 + $0x14] sm:$0x3]
      %v182 = vld [vmem:[%s157 + $0x16] sm:$0x3]
      %v183 = vld [vmem:[%s157 + $0x18] sm:$0x3]
      %v184 = vld [vmem:[%s157 + $0x1a] sm:$0x3]
      %v185 = vld [vmem:[%s157 + $0x1c] sm:$0x3]
      %v186 = vld [vmem:[%s157 + $0x1e] sm:$0x3]
      %v187 = vld [vmem:[%s163] sm:$0xff]
      %v188 = vld [vmem:[%s163 + $0x8] sm:$0xff]
      %v191 = vcombine.high %v187, %v187
      %v193 = vunpack.c.l.s4 1966171168
      %v194 = vunpack.c.0.s8 %v193
      %v195 = vlaneseq
      %v196 = vshrl.u32 %v195, 7
      %v197 = vsub.s32 %v194, %v196
      %v198 = vrot.slane %v187, %v197
      %v200 = vunpack.c.l.s4 1966171168
      %v201 = vunpack.c.0.s8 %v200
      %v202 = vlaneseq
      %v203 = vshrl.u32 %v202, 7
      %v204 = vsub.s32 %v201, %v203
      %v205 = vrot.slane %v191, %v204
      %v206 = vcombine.high %v198, %v198
      %v207 = vcombine.high %v205, %v205
      %v209 = vunpack.c.l.s4 1966171168
      %v210 = vunpack.c.0.s8 %v209
      %v211 = vlaneseq
      %v212 = vshrl.u32 %v211, 7
      %v213 = vsub.s32 %v210, %v212
      %v214 = vrot.slane %v198, %v213
      %v216 = vunpack.c.l.s4 1966171168
      %v217 = vunpack.c.0.s8 %v216
      %v218 = vlaneseq
      %v219 = vshrl.u32 %v218, 7
      %v220 = vsub.s32 %v217, %v219
      %v221 = vrot.slane %v205, %v220
      %v223 = vunpack.c.l.s4 1966171168
      %v224 = vunpack.c.0.s8 %v223
      %v225 = vlaneseq
      %v226 = vshrl.u32 %v225, 7
      %v227 = vsub.s32 %v224, %v226
      %v228 = vrot.slane %v206, %v227
      %v230 = vunpack.c.l.s4 1966171168
      %v231 = vunpack.c.0.s8 %v230
      %v232 = vlaneseq
      %v233 = vshrl.u32 %v232, 7
      %v234 = vsub.s32 %v231, %v233
      %v235 = vrot.slane %v207, %v234
      %v236 = vcombine.high %v214, %v214
      %v237 = vcombine.high %v221, %v221
      %v238 = vcombine.high %v228, %v228
      %v239 = vcombine.high %v235, %v235
      %v240 = vcombine.high %v188, %v188
      %v242 = vunpack.c.l.s4 1966171168
      %v243 = vunpack.c.0.s8 %v242
      %v244 = vlaneseq
      %v245 = vshrl.u32 %v244, 7
      %v246 = vsub.s32 %v243, %v245
      %v247 = vrot.slane %v188, %v246
      %v249 = vunpack.c.l.s4 1966171168
      %v250 = vunpack.c.0.s8 %v249
      %v251 = vlaneseq
      %v252 = vshrl.u32 %v251, 7
      %v253 = vsub.s32 %v250, %v252
      %v254 = vrot.slane %v240, %v253
      %v255 = vcombine.high %v247, %v247
      %v256 = vcombine.high %v254, %v254
      %v258 = vunpack.c.l.s4 1966171168
      %v259 = vunpack.c.0.s8 %v258
      %v260 = vlaneseq
      %v261 = vshrl.u32 %v260, 7
      %v262 = vsub.s32 %v259, %v261
      %v263 = vrot.slane %v247, %v262
      %v265 = vunpack.c.l.s4 1966171168
      %v266 = vunpack.c.0.s8 %v265
      %v267 = vlaneseq
      %v268 = vshrl.u32 %v267, 7
      %v269 = vsub.s32 %v266, %v268
      %v270 = vrot.slane %v254, %v269
      %v272 = vunpack.c.l.s4 1966171168
      %v273 = vunpack.c.0.s8 %v272
      %v274 = vlaneseq
      %v275 = vshrl.u32 %v274, 7
      %v276 = vsub.s32 %v273, %v275
      %v277 = vrot.slane %v255, %v276
      %v279 = vunpack.c.l.s4 1966171168
      %v280 = vunpack.c.0.s8 %v279
      %v281 = vlaneseq
      %v282 = vshrl.u32 %v281, 7
      %v283 = vsub.s32 %v280, %v282
      %v284 = vrot.slane %v256, %v283
      %v285 = vcombine.high %v263, %v263
      %v286 = vcombine.high %v270, %v270
      %v287 = vcombine.high %v277, %v277
      %v288 = vcombine.high %v284, %v284
      %v289 = vlaneseq
      %v290 = vshrl.u32 %v289, 7
      %v291 = vsub.s32 0, %v290
      %v292 = vrot.slane %v214, %v291
      %v293 = vlaneseq
      %v294 = vshrl.u32 %v293, 7
      %v295 = vsub.s32 0, %v294
      %v296 = vrot.slane %v228, %v295
      %v297 = vlaneseq
      %v298 = vshrl.u32 %v297, 7
      %v299 = vsub.s32 0, %v298
      %v300 = vrot.slane %v236, %v299
      %v301 = vlaneseq
      %v302 = vshrl.u32 %v301, 7
      %v303 = vsub.s32 0, %v302
      %v304 = vrot.slane %v238, %v303
      %v305 = vlaneseq
      %v306 = vshrl.u32 %v305, 7
      %v307 = vsub.s32 0, %v306
      %v308 = vrot.slane %v221, %v307
      %v309 = vlaneseq
      %v310 = vshrl.u32 %v309, 7
      %v311 = vsub.s32 0, %v310
      %v312 = vrot.slane %v235, %v311
      %v313 = vlaneseq
      %v314 = vshrl.u32 %v313, 7
      %v315 = vsub.s32 0, %v314
      %v316 = vrot.slane %v237, %v315
      %v317 = vlaneseq
      %v318 = vshrl.u32 %v317, 7
      %v319 = vsub.s32 0, %v318
      %v320 = vrot.slane %v239, %v319
      %v321 = vlaneseq
      %v322 = vshrl.u32 %v321, 7
      %v323 = vsub.s32 0, %v322
      %v324 = vrot.slane %v263, %v323
      %v325 = vlaneseq
      %v326 = vshrl.u32 %v325, 7
      %v327 = vsub.s32 0, %v326
      %v328 = vrot.slane %v277, %v327
      %v329 = vlaneseq
      %v330 = vshrl.u32 %v329, 7
      %v331 = vsub.s32 0, %v330
      %v332 = vrot.slane %v285, %v331
      %v333 = vlaneseq
      %v334 = vshrl.u32 %v333, 7
      %v335 = vsub.s32 0, %v334
      %v336 = vrot.slane %v287, %v335
      %v337 = vlaneseq
      %v338 = vshrl.u32 %v337, 7
      %v339 = vsub.s32 0, %v338
      %v340 = vrot.slane %v270, %v339
      %v341 = vlaneseq
      %v342 = vshrl.u32 %v341, 7
      %v343 = vsub.s32 0, %v342
      %v344 = vrot.slane %v284, %v343
      %v345 = vlaneseq
      %v346 = vshrl.u32 %v345, 7
      %v347 = vsub.s32 0, %v346
      %v348 = vrot.slane %v286, %v347
      %v349 = vlaneseq
      %v350 = vshrl.u32 %v349, 7
      %v351 = vsub.s32 0, %v350
      %v352 = vrot.slane %v288, %v351
      %v369 = vadd.f32 %v171, %v292
      %v370 = vadd.f32 %v172, %v296
      %v371 = vadd.f32 %v173, %v300
      %v372 = vadd.f32 %v174, %v304
      %v373 = vadd.f32 %v175, %v308
      %v374 = vadd.f32 %v176, %v312
      %v375 = vadd.f32 %v177, %v316
      %v376 = vadd.f32 %v178, %v320
      %v377 = vadd.f32 %v179, %v324
      %v378 = vadd.f32 %v180, %v328
      %v379 = vadd.f32 %v181, %v332
      %v380 = vadd.f32 %v182, %v336
      %v381 = vadd.f32 %v183, %v340
      %v382 = vadd.f32 %v184, %v344
      %v383 = vadd.f32 %v185, %v348
      %v384 = vadd.f32 %v186, %v352
      %vm385 = vcmask 254976
      %386 = vst.msk [vmem:[%s169] sm:$0x3] %vm385, %v369
      %387 = vst.msk [vmem:[%s169 + $0x2] sm:$0x3] %vm385, %v370
      %388 = vst.msk [vmem:[%s169 + $0x4] sm:$0x3] %vm385, %v371
      %389 = vst.msk [vmem:[%s169 + $0x6] sm:$0x3] %vm385, %v372
      %390 = vst.msk [vmem:[%s169 + $0x8] sm:$0x3] %vm385, %v373
      %391 = vst.msk [vmem:[%s169 + $0xa] sm:$0x3] %vm385, %v374
      %392 = vst.msk [vmem:[%s169 + $0xc] sm:$0x3] %vm385, %v375
      %393 = vst.msk [vmem:[%s169 + $0xe] sm:$0x3] %vm385, %v376
      %394 = vst.msk [vmem:[%s169 + $0x10] sm:$0x3] %vm385, %v377
      %395 = vst.msk [vmem:[%s169 + $0x12] sm:$0x3] %vm385, %v378
      %396 = vst.msk [vmem:[%s169 + $0x14] sm:$0x3] %vm385, %v379
      %397 = vst.msk [vmem:[%s169 + $0x16] sm:$0x3] %vm385, %v380
      %398 = vst.msk [vmem:[%s169 + $0x18] sm:$0x3] %vm385, %v381
      %399 = vst.msk [vmem:[%s169 + $0x1a] sm:$0x3] %vm385, %v382
      %400 = vst.msk [vmem:[%s169 + $0x1c] sm:$0x3] %vm385, %v383
      %401 = vst.msk [vmem:[%s169 + $0x1e] sm:$0x3] %vm385, %v384
      %s402 = smul.u32 16, %s15
      %p403 = scmp.lt.s32.totalorder %s402, 63
      %s404 = scalar_select %p403, %s402, 63
      %s405 = smul.addr %s404, 2
      %s406 = scalar_lea.vmem %s3, %s405
      // Predicated region
      $region29: #{tpu_custom_call.1} parent=27 // pred_check
        %p407 = pneg %p85
      $region30: #{tpu_custom_call.1} parent=27 // pred_check_branch
        %409 = sbr.rel (%p407) target = $region32
      $region31: #{tpu_custom_call.1} parent=27 // pred_region
        %s410 = smul.u32 16, %s15
      $region32: #{tpu_custom_call.1} parent=27 // pred_fallthru
        _
    $region28: #{tpu_custom_call.1} parent=5 // pred_fallthru
      _
    %p411 = scmp.le.s32.totalorder 2, %s10
    // Predicated region
    $region33: #{tpu_custom_call.1} parent=5 // pred_check
      %p412 = pneg %p411
    $region34: #{tpu_custom_call.1} parent=5 // pred_check_branch
      %414 = sbr.rel (%p412) target = $region36
    $region35: #{tpu_custom_call.1} parent=5 // pred_region
      %s415 = ssub.s32 %s10, 2
      // Predicated region
      $region37: #{tpu_custom_call.1} parent=35 // pred_check
        %p416 = pneg %p91
      $region38: #{tpu_custom_call.1} parent=35 // pred_check_branch
        %418 = sbr.rel (%p416) target = $region40
      $region39: #{tpu_custom_call.1} parent=35 // pred_region
        %s419 = smul.u32 16, %s16
        %p420 = scmp.lt.s32.totalorder %s419, 63
        %s421 = scalar_select %p420, %s419, 63
        %s422 = smul.addr %s421, 2
        %s423 = scalar_lea.vmem %s3, %s422
      $region40: #{tpu_custom_call.1} parent=35 // pred_fallthru
        _
    $region36: #{tpu_custom_call.1} parent=5 // pred_fallthru
      _
  $region6: #{tpu_custom_call.1} parent=0 // loop_footer
    %s14 = sadd.s32 1, %s10
  $region7: #{tpu_custom_call.1} parent=0 // loop_footer_branch
    %9 = sbr.rel target = $region3
  $region8: #{tpu_custom_call.1} parent=0 // loop_exit
    _

</llo_original>
